<compile_context>
chip_gen: v7x
topology: tpu7x:2x2x1
jax: 0.10.0
libtpu: 0.0.40
codegen_flags: <defaults>
</compile_context>

<pallas_src>
import jax
import jax.numpy as jnp
from jax import lax
from jax.experimental import pallas as pl
from jax.experimental.pallas import tpu as pltpu

_MAX_TILE_ROWS = 4096   # 4096 * 512 * 4 B = 8 MiB per output tile
_SMALL_ROWS = 256       # <= ~512 KiB: one grid step, not worth splitting


def _uniform_from_bits(bits_u32):
    """Mantissa trick: top 23 random bits -> float32 in [0, 1). Pure VALU."""
    mant = (bits_u32 >> jnp.uint32(9)) | jnp.uint32(0x3F800000)
    return lax.bitcast_convert_type(mant, jnp.float32) - jnp.float32(1.0)


def _rand_kernel_hw(seed_ref, o_ref):
    """Hardware-PRNG path (TPU): bit generation off the VALU -> HBM-bound."""
    # Per-block reseed keeps the stream independent of grid order / megacore
    # sharding.  int32 wrap-around on the salt is intentional and harmless.
    pltpu.prng_seed(seed_ref[0] + pl.program_id(0) * jnp.int32(0x2545F491))
    bits = pltpu.bitcast(pltpu.prng_random_bits(o_ref.shape), jnp.uint32)
    o_ref[...] = _uniform_from_bits(bits)


def _rand_kernel_hash(seed_ref, o_ref):
    """Stateless counter-hash fallback (non-TPU backends / interpret mode)."""
    tile_r, lanes = o_ref.shape
    shift = jnp.uint32(lanes.bit_length() - 1)           # lanes is a power of 2
    base = (pl.program_id(0) * tile_r).astype(jnp.uint32)
    row = lax.broadcasted_iota(jnp.int32, (tile_r, lanes), 0).astype(jnp.uint32)
    col = lax.broadcasted_iota(jnp.int32, (tile_r, lanes), 1).astype(jnp.uint32)
    idx = ((base + row) << shift) | col                  # global element index
    key = seed_ref[0].astype(jnp.uint32)
    # Single-multiply mixer (the key*const is a hoisted scalar op).
    x = idx ^ (key * jnp.uint32(0x9E3779B9) + jnp.uint32(0x7F4A7C15))
    x = x ^ (x >> jnp.uint32(16))
    x = x * jnp.uint32(0x85EBCA6B)
    x = x ^ (x >> jnp.uint32(13))
    o_ref[...] = _uniform_from_bits(x)


def my_awesome_model_forward(img, img_prev, seed=0):
    """Pallas equivalent of MyAwesomeModel.forward.

    Returns a uniform random float32 tensor of shape (B, 2, H, W) in [0, 1).
    The inputs only supply shape information (the reference forward ignores
    their values).  Pass a fresh `seed` per call to mimic torch.rand.
    """
    del img_prev  # unused by the reference forward
    B, _, H, W = img.shape
    n = B * 2 * H * W

    # Widest lane-dense last dim (multiple of 128) dividing n -> the final
    # reshape is a free metadata op.  Ragged sizes fall back to 512 + tail slice.
    lanes = next((l for l in (512, 256, 128) if n % l == 0), 512)
    rows = pl.cdiv(n, lanes)

    if rows <= _SMALL_ROWS:
        tile_r = rows                     # single full-array block
        num_tiles = 1
    else:
        # Aim for >= ~4 grid steps (dual-TC sharding on v7x + pipelined
        # writeback), capped at 8 MiB tiles; last partial block is masked.
        tile_r = min(_MAX_TILE_ROWS, max(8, pl.cdiv(pl.cdiv(rows, 4), 8) * 8))
        num_tiles = pl.cdiv(rows, tile_r)

    seed_arr = jnp.asarray([seed], dtype=jnp.int32)
    kernel = _rand_kernel_hw if jax.default_backend() == "tpu" else _rand_kernel_hash

    out_flat = pl.pallas_call(
        kernel,
        out_shape=jax.ShapeDtypeStruct((rows, lanes), jnp.float32),
        grid=(num_tiles,),
        in_specs=[pl.BlockSpec(memory_space=pltpu.MemorySpace.SMEM)],
        out_specs=pl.BlockSpec((tile_r, lanes), lambda i: (i, 0)),
        compiler_params=pltpu.CompilerParams(
            dimension_semantics=("parallel",),
            vmem_limit_bytes=40 << 20),
        cost_estimate=pl.CostEstimate(
            flops=8 * n, transcendentals=0, bytes_accessed=4 * n),
    )(seed_arr)

    if n % lanes == 0:
        return out_flat.reshape(B, 2, H, W)          # free metadata reshape
    return out_flat.reshape(-1)[:n].reshape(B, 2, H, W)


if __name__ == "__main__":
    key = jax.random.PRNGKey(0)
    k1, k2 = jax.random.split(key)

    # Small NCHW shapes consistent with the module.
    B, C, H, W = 2, 4, 16, 16
    img = jax.random.normal(k1, (B, C, H, W), dtype=jnp.float32)
    img_prev = jax.random.normal(k2, (B, C, H, W), dtype=jnp.float32)

    pred = my_awesome_model_forward(img, img_prev, seed=0)
    pred = jax.block_until_ready(pred)

    assert pred.shape == (B, 2, H, W), pred.shape
    assert pred.dtype == jnp.float32, pred.dtype
    assert bool(jnp.all(pred >= 0.0)) and bool(jnp.all(pred < 1.0))
    # Sanity: values vary per element and per seed.
    assert float(jnp.std(pred)) > 0.1
    pred2 = jax.block_until_ready(my_awesome_model_forward(img, img_prev, seed=1))
    assert float(jnp.max(jnp.abs(pred - pred2))) > 0.0

    print("KERNEL_OK")
</pallas_src>

<mosaic_0001>
module attributes {stable_mosaic.version = 11 : i64} {
  func.func @_rand_kernel_hash(%arg0: i32, %arg1: memref<1xi32, #tpu.memory_space<smem>>, %arg2: memref<2x512xf32, #tpu.memory_space<vmem>>) attributes {dimension_semantics = [#tpu.dimension_semantics<parallel>], iteration_bounds = array<i64: 1>, scalar_prefetch = 0 : i64, scratch_operands = 0 : i64, tpu.core_type = #tpu.core_type<tc>, window_params = [{transform_indices = @transform_0, window_bounds = array<i64: 1>}, {transform_indices = @transform_1, window_bounds = array<i64: 2, 512>}]} {
    %c2_i32 = arith.constant 2 : i32
    %0 = arith.muli %arg0, %c2_i32 : i32
    %1 = tpu.iota {dimensions = array<i32: 0>} : vector<2x512xi32>
    %2 = tpu.iota {dimensions = array<i32: 1>} : vector<2x512xi32>
    %3 = vector.broadcast %0 : i32 to vector<2x512xi32>
    %4 = arith.addi %3, %1 : vector<2x512xi32>
    %c9_i32 = arith.constant 9 : i32
    %5 = vector.broadcast %c9_i32 : i32 to vector<2x512xi32>
    %6 = arith.shli %4, %5 : vector<2x512xi32>
    %7 = arith.ori %6, %2 : vector<2x512xi32>
    %c0 = arith.constant 0 : index
    %8 = memref.load %arg1[%c0] : memref<1xi32, #tpu.memory_space<smem>>
    %c-1640531527_i32 = arith.constant -1640531527 : i32
    %9 = arith.muli %8, %c-1640531527_i32 : i32
    %c2135587861_i32 = arith.constant 2135587861 : i32
    %10 = arith.addi %9, %c2135587861_i32 : i32
    %11 = vector.broadcast %10 : i32 to vector<2x512xi32>
    %12 = arith.xori %7, %11 : vector<2x512xi32>
    %c16_i32 = arith.constant 16 : i32
    %13 = vector.broadcast %c16_i32 : i32 to vector<2x512xi32>
    %14 = arith.shrui %12, %13 : vector<2x512xi32>
    %15 = arith.xori %12, %14 : vector<2x512xi32>
    %c-2048144789_i32 = arith.constant -2048144789 : i32
    %16 = vector.broadcast %c-2048144789_i32 : i32 to vector<2x512xi32>
    %17 = arith.muli %15, %16 : vector<2x512xi32>
    %c13_i32 = arith.constant 13 : i32
    %18 = vector.broadcast %c13_i32 : i32 to vector<2x512xi32>
    %19 = arith.shrui %17, %18 : vector<2x512xi32>
    %20 = arith.xori %17, %19 : vector<2x512xi32>
    %c9_i32_0 = arith.constant 9 : i32
    %21 = vector.broadcast %c9_i32_0 : i32 to vector<2x512xi32>
    %22 = arith.shrui %20, %21 : vector<2x512xi32>
    %c1065353216_i32 = arith.constant 1065353216 : i32
    %23 = vector.broadcast %c1065353216_i32 : i32 to vector<2x512xi32>
    %24 = arith.ori %22, %23 : vector<2x512xi32>
    %25 = tpu.bitcast %24 : vector<2x512xi32> -> vector<2x512xf32>
    %cst = arith.constant 1.000000e+00 : f32
    %26 = vector.broadcast %cst : f32 to vector<2x512xf32>
    %27 = arith.subf %25, %26 : vector<2x512xf32>
    %c0_1 = arith.constant 0 : index
    %c0_2 = arith.constant 0 : index
    %28 = vector.load %arg2[%c0_1, %c0_2] : memref<2x512xf32, #tpu.memory_space<vmem>>, vector<2x512xf32>
    tpu.vector_store %arg2[%c0_1, %c0_2], %27 {strides = array<i32>} : memref<2x512xf32, #tpu.memory_space<vmem>>, vector<2x512xf32>,
    return
  }
  func.func @transform_0(%arg0: i32) -> i32 {
    %c0_i32 = arith.constant 0 : i32
    %c0_i32_0 = arith.constant 0 : i32
    return %c0_i32 : i32
  }
  func.func @transform_1(%arg0: i32) -> (i32, i32) {
    %c0_i32 = arith.constant 0 : i32
    %c0_i32_0 = arith.constant 0 : i32
    return %arg0, %c0_i32 : i32, i32
  }
}

</mosaic_0001>

<llo_original>
// kernel: tpu_custom_call.1
$region0: #{tpu_custom_call.1}
  #allocation0 [shape = 'u32[]', space=smem, size = 0x4, offset = 0x4, fixed_abs, tag = 'smem constant byte address 0x4 - core index']
  #allocation1 [shape = 'u32[144,128]{1,0:T(1,128)}', space=vmem, size = 0x12000, scoped, tag = 'internal scratch']
  #allocation2 [shape = 's32[1]{0:T(128)S(6)}', space=smem, size = 0x200, scoped, tag = 'scoped memory for tpu_custom_call.1']
  %s0 = inlined_call_operand.<no memory space> [shape: s32[1], index: 0, kind: input, shape index: {}]
  %s1 = inlined_call_operand.hbm [shape: f32[2,512], index: 1, kind: output, shape index: {}]
  %s2 = sld [smem:[#allocation0]]
  $region14: #{tpu_custom_call.1} parent=0
    _
  %s4 = ssub.s32 1, %s2
  %s5 = scalar_select 0, %s4, %s2
  %6 = sst [smem:[#allocation2]] %s0
  $region1: #{tpu_custom_call.1} parent=0
    #allocation3 [shape = 'u8[4096]{0}', space=vmem, size = 0x1000, scoped, tag = 'output window, operand 0, single buffered']
    #allocation4 [shape = 's32[1]{0}', space=sflag, size = 0x4, scoped, tag = 'scoped memory for tpu_custom_call.1']
    %7 = vsyncpa [#allocation4], 0
    // Predicated region
    $region2: #{tpu_custom_call.1} parent=1 // pred_check
      _
    $region3: #{tpu_custom_call.1} parent=1 // pred_check_branch
      %9 = sbr.rel (0) target = $region5
    $region4: #{tpu_custom_call.1} parent=1 // pred_region
      _
    $region5: #{tpu_custom_call.1} parent=1 // pred_fallthru
      _
    %s10 = smul.u32 0, 2
    %v11 = vlaneseq
    %v12 = vshrl.u32 %v11, 7
    %v13 = vlaneseq
    %v14 = vand.u32 %v13, 127
    %v15 = vadd.s32 %v14, 128
    %v16 = vadd.s32 %v14, 256
    %v17 = vadd.s32 %v14, 384
    %v18 = vstv %s10
    %v19 = vadd.s32 %v18, %v12
    %v20 = vshll.u32 %v19, 9
    %v21 = vor.u32 %v20, %v14
    %v22 = vor.u32 %v20, %v15
    %v23 = vor.u32 %v20, %v16
    %v24 = vor.u32 %v20, %v17
    %s25 = sld [smem:[#allocation2]]
    %s26 = smul.u32 %s25, 2654435769
    %s27 = sadd.s32 %s26, 2135587861
    %v28 = vstv %s27
    %v29 = vxor.u32 %v21, %v28
    %v30 = vxor.u32 %v22, %v28
    %v31 = vxor.u32 %v23, %v28
    %v32 = vxor.u32 %v24, %v28
    %v33 = vshrl.u32 %v29, 16
    %v34 = vshrl.u32 %v30, 16
    %v35 = vshrl.u32 %v31, 16
    %v36 = vshrl.u32 %v32, 16
    %v37 = vxor.u32 %v29, %v33
    %v38 = vxor.u32 %v30, %v34
    %v39 = vxor.u32 %v31, %v35
    %v40 = vxor.u32 %v32, %v36
    %v41 = vmul.u32 %v37, 2246822507
    %v42 = vmul.u32 %v38, 2246822507
    %v43 = vmul.u32 %v39, 2246822507
    %v44 = vmul.u32 %v40, 2246822507
    %v45 = vshrl.u32 %v41, 13
    %v46 = vshrl.u32 %v42, 13
    %v47 = vshrl.u32 %v43, 13
    %v48 = vshrl.u32 %v44, 13
    %v49 = vxor.u32 %v41, %v45
    %v50 = vxor.u32 %v42, %v46
    %v51 = vxor.u32 %v43, %v47
    %v52 = vxor.u32 %v44, %v48
    %v53 = vshrl.u32 %v49, 9
    %v54 = vshrl.u32 %v50, 9
    %v55 = vshrl.u32 %v51, 9
    %v56 = vshrl.u32 %v52, 9
    %v57 = vor.u32 %v53, 1065353216
    %v58 = vor.u32 %v54, 1065353216
    %v59 = vor.u32 %v55, 1065353216
    %v60 = vor.u32 %v56, 1065353216
    %v65 = vsub.f32 %v57, 1.0
    %v66 = vsub.f32 %v58, 1.0
    %v67 = vsub.f32 %v59, 1.0
    %v68 = vsub.f32 %v60, 1.0
    %v73 = vcombine.low %v65, %v66
    %v74 = vcombine.low %v67, %v68
    %v76 = vunpack.c.l.s4 1983009808
    %v77 = vunpack.c.0.s8 %v76
    %v78 = vlaneseq
    %v79 = vshrl.u32 %v78, 7
    %v80 = vsub.s32 %v77, %v79
    %v81 = vrot.slane %v73, %v80
    %v83 = vunpack.c.l.s4 1983009808
    %v84 = vunpack.c.0.s8 %v83
    %v85 = vlaneseq
    %v86 = vshrl.u32 %v85, 7
    %v87 = vsub.s32 %v84, %v86
    %v88 = vrot.slane %v74, %v87
    %v89 = vcombine.low %v81, %v88
    %91 = vst [vmem:[#allocation3] sm:$0xff] %v89
    // Predicated region
    $region6: #{tpu_custom_call.1} parent=1 // pred_check
      _
    $region7: #{tpu_custom_call.1} parent=1 // pred_check_branch
      %93 = sbr.rel (0) target = $region9
    $region8: #{tpu_custom_call.1} parent=1 // pred_region
      %s95 = ssub.s32 128, 128
      %96 = vsyncadd [#allocation4], %s95
      %s98 = sshll.u32 [#allocation3], 4
      %s99 = int_to_ptr.vmem [resolvable:$true] %s98
      %101 = dma.vmem_to_hbm [thread:$0]  %s99, 128, %s1, [#allocation4]
    $region9: #{tpu_custom_call.1} parent=1 // pred_fallthru
      _
    // Predicated region
    $region10: #{tpu_custom_call.1} parent=1 // pred_check
      _
    $region11: #{tpu_custom_call.1} parent=1 // pred_check_branch
      %103 = sbr.rel (0) target = $region13
    $region12: #{tpu_custom_call.1} parent=1 // pred_region
      %104 = dma.done [#allocation4], 128
    $region13: #{tpu_custom_call.1} parent=1 // pred_fallthru
      _
    %105 = vsyncpa [#allocation4], 1

</llo_original>
